<compile_context>
chip_gen: v7x
topology: tpu7x:2x2x1
jax: 0.10.0
libtpu: 0.0.40
codegen_flags: <defaults>
</compile_context>

<pallas_src>
import jax
import jax.numpy as jnp
from jax.experimental import pallas as pl
from jax.experimental.pallas import tpu as pltpu

# -------------------- model hyper-parameters (from __init__) ----------------
NFEAT = 4
NCODE = 3
NHIDDEN = 128
NHIDDEN2 = 35
LEAKY_SLOPE = 0.01          # nn.LeakyReLU default negative_slope

LANE = 128                  # wide (hidden) lane width
PACK = 16                   # narrow packed lane width for I/O and the head

# Packed lane offsets.  These tie pack_params(), the kernel and the wrapper
# unpacking together -- the whole scheme relies on the zero padding of the
# packed weights/biases outside these ranges, so keep them consistent.
#   input  slab : x      @ [0, NFEAT)        eps @ [LV_OFF, LV_OFF+NCODE)
#   head        : logvar @ [LV_OFF, ...)     mu  @ [MU_OFF, MU_OFF+NCODE)
#   output slab : recon  @ [0, NFEAT)        logvar @ LV_OFF..  mu @ MU_OFF..
LV_OFF = 4
MU_OFF = 8
assert NFEAT <= LV_OFF
assert LV_OFF + NCODE <= MU_OFF
assert MU_OFF + NCODE <= PACK


def _round_up(n, m):
    return (n + m - 1) // m * m


def _leaky_relu(x):
    return jnp.where(x > 0, x, LEAKY_SLOPE * x)


# ------------------------------ the kernel ----------------------------------
def infovae_kernel(xe_ref, wn_ref, ww_ref, wo_ref, b_ref, out_ref):
    bf16 = jnp.bfloat16
    f32 = jnp.float32

    xe = xe_ref[...]                                # [TB,16] f32: x@[0,4), eps@[4,7)

    # ----- encode -----
    # TODO(synk): dropout (p=0.2) layers d1..d4 are identity here (eval mode).
    # wn[0] rows >= NFEAT are zero, so the eps lanes do not leak into h1.
    h1 = _leaky_relu(
        jnp.dot(xe.astype(bf16), wn_ref[0], preferred_element_type=f32)
        + b_ref[0:1, :])                            # [TB,128]
    h2 = _leaky_relu(
        jnp.dot(h1.astype(bf16), ww_ref[0], preferred_element_type=f32)
        + b_ref[1:2, :])                            # real lanes [0,35), rest exactly 0

    # Fused mu|logvar head, packed into 16 lanes: logvar @ [4,7), mu @ [8,11).
    head = (jnp.dot(h2.astype(bf16), wo_ref[0], preferred_element_type=f32)
            + b_ref[2:3, 0:PACK])                   # [TB,16]

    # ----- reparameterize (single select, all in the 16-lane packed domain) -----
    # lanes >= MU_OFF: mu passes through; lanes < MU_OFF: eps * exp(0.5*logvar).
    # Lanes [0,NFEAT) end up holding raw x (head==0 there) -- harmless because
    # wn[1] rows [0,NFEAT) are zero.
    lane = jax.lax.broadcasted_iota(jnp.int32, head.shape, 1)
    zc = jnp.where(lane >= MU_OFF, head, xe * jnp.exp(0.5 * head))

    # ----- decode -----
    # wn[1] carries w_decd duplicated on the eps*std lanes (4..6) and the mu
    # lanes (8..10), so  zc @ wn[1] == (mu + eps*std) @ w_decd == z @ w_decd.
    d1 = _leaky_relu(
        jnp.dot(zc.astype(bf16), wn_ref[1], preferred_element_type=f32)
        + b_ref[3:4, :])                            # real lanes [0,35), rest 0
    d2 = _leaky_relu(
        jnp.dot(d1.astype(bf16), ww_ref[1], preferred_element_type=f32)
        + b_ref[4:5, :])                            # [TB,128]
    recon = (jnp.dot(d2.astype(bf16), wo_ref[1], preferred_element_type=f32)
             + b_ref[5:6, 0:PACK])                  # recon @ [0,4), lanes [4,16) exactly 0

    # Single narrow packed store: recon | logvar | mu on non-overlapping lanes.
    # (Relies on wo[1]/b[5] being zero outside lanes [0,NFEAT) and head being
    #  zero outside [LV_OFF,LV_OFF+NCODE) U [MU_OFF,MU_OFF+NCODE).)
    out_ref[...] = (recon + head).astype(out_ref.dtype)


# ------------------------------ packing --------------------------------------
def pack_params(p):
    """Packs the 7 Linear layers into 3 bf16 weight slabs + 1 f32 bias slab.

    NOTE: the zero padding below is load-bearing -- the kernel's packed
    input/output lanes and the `recon + head` output fusion rely on it.
    """
    f32 = jnp.float32
    wn = jnp.zeros((2, PACK, LANE), f32)   # narrow-in  : encd, decd
    ww = jnp.zeros((2, LANE, LANE), f32)   # wide       : enc2, dec2
    wo = jnp.zeros((2, LANE, PACK), f32)   # narrow-out : fused mu|lv head, outp
    b = jnp.zeros((8, LANE), f32)

    # narrow-in 0: encd [NFEAT,NHIDDEN]; rows [NFEAT,PACK) stay 0 (eps lanes).
    wn = wn.at[0, :NFEAT, :NHIDDEN].set(p["w_encd"].astype(f32))
    b = b.at[0, :NHIDDEN].set(p["b_encd"].reshape(-1).astype(f32))
    # narrow-in 1: decd [NCODE,NHIDDEN2] duplicated on eps*std and mu lanes;
    # rows [0,NFEAT) stay 0 (they carry raw x inside zc).
    wn = wn.at[1, LV_OFF:LV_OFF + NCODE, :NHIDDEN2].set(p["w_decd"].astype(f32))
    wn = wn.at[1, MU_OFF:MU_OFF + NCODE, :NHIDDEN2].set(p["w_decd"].astype(f32))
    b = b.at[3, :NHIDDEN2].set(p["b_decd"].reshape(-1).astype(f32))

    # wide 0: enc2 [NHIDDEN,NHIDDEN2]  /  wide 1: dec2 [NHIDDEN2,NHIDDEN]
    ww = ww.at[0, :NHIDDEN, :NHIDDEN2].set(p["w_enc2"].astype(f32))
    b = b.at[1, :NHIDDEN2].set(p["b_enc2"].reshape(-1).astype(f32))
    ww = ww.at[1, :NHIDDEN2, :NHIDDEN].set(p["w_dec2"].astype(f32))
    b = b.at[4, :NHIDDEN].set(p["b_dec2"].reshape(-1).astype(f32))

    # narrow-out 0: fused head -> logvar @ [LV_OFF,..), mu @ [MU_OFF,..)
    wo = wo.at[0, :NHIDDEN2, LV_OFF:LV_OFF + NCODE].set(p["w_lv"].astype(f32))
    wo = wo.at[0, :NHIDDEN2, MU_OFF:MU_OFF + NCODE].set(p["w_mu"].astype(f32))
    b = b.at[2, LV_OFF:LV_OFF + NCODE].set(p["b_lv"].reshape(-1).astype(f32))
    b = b.at[2, MU_OFF:MU_OFF + NCODE].set(p["b_mu"].reshape(-1).astype(f32))
    # narrow-out 1: outp [NHIDDEN,NFEAT]; cols [NFEAT,PACK) stay 0 (head is
    # added on top of recon for the packed store).
    wo = wo.at[1, :NHIDDEN, :NFEAT].set(p["w_outp"].astype(f32))
    b = b.at[5, :NFEAT].set(p["b_outp"].reshape(-1).astype(f32))

    bf16 = jnp.bfloat16
    return wn.astype(bf16), ww.astype(bf16), wo.astype(bf16), b


# ------------------------------ wrapper --------------------------------------
def infovae_forward(x, eps, wn, ww, wo, b, *, block_rows=2048):
    """InfoVAE forward pass.

    Args:
      x:   [B, NFEAT] input.
      eps: [B, NCODE] reparameterization noise.
      wn, ww, wo, b: packed parameters from pack_params().
      block_rows: batch tile (multiple of 8). 2048 amortizes per-step overhead
        while keeping live VMEM (~5 x [TB,128] f32) well inside every
        generation's scoped VMEM budget (v5e 16 MiB default, v7x 32/64 MiB).
    Returns:
      (recon_x [B, NFEAT], mu [B, NCODE], logvar [B, NCODE])
    """
    B = x.shape[0]
    b8 = _round_up(max(B, 1), 8)
    tb = min(max(8, _round_up(int(block_rows), 8)), b8)
    # Keep >= 2 grid steps whenever the batch allows it so the "parallel"
    # batch axis actually shards across both TensorCores on v7x.
    if b8 >= 16:
        tb = min(tb, _round_up((b8 + 1) // 2, 8))
    b_pad = _round_up(B, tb)
    grid = b_pad // tb

    # One narrow packed input slab: x -> lanes [0,NFEAT), eps -> logvar lanes.
    xe = jnp.zeros((b_pad, PACK), jnp.float32)
    xe = xe.at[:B, :NFEAT].set(x.astype(jnp.float32))
    xe = xe.at[:B, LV_OFF:LV_OFF + NCODE].set(eps.astype(jnp.float32))

    # Padded MXU work actually issued: 2 wide [TB,128]x[128,128] + 4 narrow
    # [TB,16]x[16,128] / [TB,128]x[128,16] matmuls per tile.
    flops = 2 * b_pad * (2 * LANE * LANE + 4 * PACK * LANE)
    bytes_accessed = (
        xe.size * 4 + b_pad * PACK * 4
        + wn.size * wn.dtype.itemsize + ww.size * ww.dtype.itemsize
        + wo.size * wo.dtype.itemsize + b.size * b.dtype.itemsize)

    out = pl.pallas_call(
        infovae_kernel,
        out_shape=jax.ShapeDtypeStruct((b_pad, PACK), jnp.float32),
        grid_spec=pltpu.PrefetchScalarGridSpec(
            num_scalar_prefetch=0,
            grid=(grid,),
            in_specs=[
                pl.BlockSpec((tb, PACK), lambda i: (i, 0)),           # x|eps tile
                pl.BlockSpec((2, PACK, LANE), lambda i: (0, 0, 0)),   # narrow-in W (resident)
                pl.BlockSpec((2, LANE, LANE), lambda i: (0, 0, 0)),   # wide W (resident)
                pl.BlockSpec((2, LANE, PACK), lambda i: (0, 0, 0)),   # narrow-out W (resident)
                pl.BlockSpec((8, LANE), lambda i: (0, 0)),            # biases (resident)
            ],
            out_specs=pl.BlockSpec((tb, PACK), lambda i: (i, 0)),
        ),
        compiler_params=pltpu.CompilerParams(
            dimension_semantics=("parallel",),
            vmem_limit_bytes=32 * 1024 * 1024,
        ),
        cost_estimate=pl.CostEstimate(
            flops=flops,
            transcendentals=b_pad * PACK,
            bytes_accessed=bytes_accessed,
        ),
    )(xe, wn, ww, wo, b)

    recon = out[:B, :NFEAT]
    mu = out[:B, MU_OFF:MU_OFF + NCODE]
    lv = out[:B, LV_OFF:LV_OFF + NCODE]
    return recon, mu, lv


# ------------------------------ init & reference -----------------------------
def init_params(key):
    """Deterministic parameter init (PyTorch nn.Linear-style uniform)."""
    def linear(key, fan_in, fan_out):
        kw, kb = jax.random.split(key)
        bound = 1.0 / jnp.sqrt(fan_in)
        w = jax.random.uniform(kw, (fan_in, fan_out), jnp.float32, -bound, bound)
        b = jax.random.uniform(kb, (1, fan_out), jnp.float32, -bound, bound)
        return w, b

    keys = jax.random.split(key, 7)
    params = {}
    params["w_encd"], params["b_encd"] = linear(keys[0], NFEAT, NHIDDEN)
    params["w_enc2"], params["b_enc2"] = linear(keys[1], NHIDDEN, NHIDDEN2)
    params["w_mu"], params["b_mu"] = linear(keys[2], NHIDDEN2, NCODE)
    params["w_lv"], params["b_lv"] = linear(keys[3], NHIDDEN2, NCODE)
    params["w_decd"], params["b_decd"] = linear(keys[4], NCODE, NHIDDEN2)
    params["w_dec2"], params["b_dec2"] = linear(keys[5], NHIDDEN2, NHIDDEN)
    params["w_outp"], params["b_outp"] = linear(keys[6], NHIDDEN, NFEAT)
    return params


def reference_forward(x, eps, p, *, mxu_bf16=False):
    """Plain-JAX reference (dropout = identity).

    mxu_bf16=True mirrors the kernel's precision exactly (bf16 matmul operands,
    f32 accumulation, f32 elementwise), so it can be compared with a tight
    tolerance; mxu_bf16=False is the pure f32 semantic reference.
    """
    if mxu_bf16:
        cast = lambda v: v.astype(jnp.bfloat16)
    else:
        cast = lambda v: v

    def dot(a, w):
        return jnp.dot(cast(a), cast(w), preferred_element_type=jnp.float32)

    h1 = _leaky_relu(dot(x, p["w_encd"]) + p["b_encd"])
    h2 = _leaky_relu(dot(h1, p["w_enc2"]) + p["b_enc2"])
    mu = dot(h2, p["w_mu"]) + p["b_mu"]
    lv = dot(h2, p["w_lv"]) + p["b_lv"]
    std_term = eps * jnp.exp(0.5 * lv)
    # Mirror the kernel: mu and eps*std enter the decoder-entry matmul as two
    # separately-rounded operands (the packed zc lanes).
    d1 = _leaky_relu(dot(mu, p["w_decd"]) + dot(std_term, p["w_decd"]) + p["b_decd"])
    d2 = _leaky_relu(dot(d1, p["w_dec2"]) + p["b_dec2"])
    recon = dot(d2, p["w_outp"]) + p["b_outp"]
    return recon, mu, lv


if __name__ == "__main__":
    key = jax.random.PRNGKey(0)
    k_param, k_x, k_eps, k_x2, k_eps2 = jax.random.split(key, 5)

    params = init_params(k_param)
    packed = pack_params(params)

    # ---- test 1: small batch that is NOT a tile multiple, tiny tile so the
    # grid has >1 step and the padded-tail path is exercised.
    B = 13
    x = jax.random.normal(k_x, (B, NFEAT), jnp.float32)
    eps = jax.random.normal(k_eps, (B, NCODE), jnp.float32)

    recon, mu, lv = infovae_forward(x, eps, *packed, block_rows=8)
    jax.block_until_ready((recon, mu, lv))

    # Tight check vs a reference that mirrors the kernel's bf16 MXU precision.
    r_bf, mu_bf, lv_bf = reference_forward(x, eps, params, mxu_bf16=True)
    assert jnp.allclose(recon, r_bf, atol=2e-3, rtol=2e-3)
    assert jnp.allclose(mu, mu_bf, atol=2e-3, rtol=2e-3)
    assert jnp.allclose(lv, lv_bf, atol=2e-3, rtol=2e-3)

    # Loose semantic sanity check vs the pure f32 reference.
    r32, mu32, lv32 = reference_forward(x, eps, params, mxu_bf16=False)
    assert jnp.allclose(recon, r32, atol=1e-1, rtol=1e-1)
    assert jnp.allclose(mu, mu32, atol=1e-1, rtol=1e-1)
    assert jnp.allclose(lv, lv32, atol=1e-1, rtol=1e-1)

    # ---- test 2: larger batch through the default (big) tile path.
    B2 = 300
    x2 = jax.random.normal(k_x2, (B2, NFEAT), jnp.float32)
    eps2 = jax.random.normal(k_eps2, (B2, NCODE), jnp.float32)
    recon2, mu2, lv2 = infovae_forward(x2, eps2, *packed)
    jax.block_until_ready((recon2, mu2, lv2))

    r2_bf, mu2_bf, lv2_bf = reference_forward(x2, eps2, params, mxu_bf16=True)
    assert jnp.allclose(recon2, r2_bf, atol=2e-3, rtol=2e-3)
    assert jnp.allclose(mu2, mu2_bf, atol=2e-3, rtol=2e-3)
    assert jnp.allclose(lv2, lv2_bf, atol=2e-3, rtol=2e-3)

    print("KERNEL_OK")
</pallas_src>

<mosaic_0001>
module attributes {stable_mosaic.version = 11 : i64} {
  func.func @infovae_kernel(%arg0: i32, %arg1: memref<8x16xf32, #tpu.memory_space<vmem>>, %arg2: memref<2x16x128xbf16, #tpu.memory_space<vmem>>, %arg3: memref<2x128x128xbf16, #tpu.memory_space<vmem>>, %arg4: memref<2x128x16xbf16, #tpu.memory_space<vmem>>, %arg5: memref<8x128xf32, #tpu.memory_space<vmem>>, %arg6: memref<8x16xf32, #tpu.memory_space<vmem>>) attributes {dimension_semantics = [#tpu.dimension_semantics<parallel>], iteration_bounds = array<i64: 2>, scalar_prefetch = 0 : i64, scratch_operands = 0 : i64, tpu.core_type = #tpu.core_type<tc>, window_params = [{transform_indices = @transform_0, window_bounds = array<i64: 8, 16>}, {pipeline_mode = #tpu.pipeline_mode<synchronous>, transform_indices = @transform_1, window_bounds = array<i64: 2, 16, 128>}, {pipeline_mode = #tpu.pipeline_mode<synchronous>, transform_indices = @transform_2, window_bounds = array<i64: 2, 128, 128>}, {pipeline_mode = #tpu.pipeline_mode<synchronous>, transform_indices = @transform_3, window_bounds = array<i64: 2, 128, 16>}, {pipeline_mode = #tpu.pipeline_mode<synchronous>, transform_indices = @transform_4, window_bounds = array<i64: 8, 128>}, {transform_indices = @transform_5, window_bounds = array<i64: 8, 16>}]} {
    %c0 = arith.constant 0 : index
    %c0_0 = arith.constant 0 : index
    %0 = vector.load %arg1[%c0, %c0_0] : memref<8x16xf32, #tpu.memory_space<vmem>>, vector<8x16xf32>
    %1 = arith.truncf %0 : vector<8x16xf32> to vector<8x16xbf16>
    %c0_1 = arith.constant 0 : index
    %c0_2 = arith.constant 0 : index
    %c0_3 = arith.constant 0 : index
    %2 = vector.load %arg2[%c0_1, %c0_2, %c0_3] : memref<2x16x128xbf16, #tpu.memory_space<vmem>>, vector<1x16x128xbf16>
    %3 = vector.shape_cast %2 : vector<1x16x128xbf16> to vector<16x128xbf16>
    %cst = arith.constant dense<0.000000e+00> : vector<8x128xf32>
    %4 = tpu.matmul %1, %3, %cst {dimension_numbers = #tpu.dot_dimension_numbers<[1], [0], [0], [1], [0, 0, 1, 1], [], []>} : vector<8x16xbf16>, vector<16x128xbf16>, vector<8x128xf32> -> vector<8x128xf32>
    %c0_4 = arith.constant 0 : index
    %c0_5 = arith.constant 0 : index
    %5 = vector.load %arg5[%c0_4, %c0_5] : memref<8x128xf32, #tpu.memory_space<vmem>>, vector<1x128xf32>
    %6 = vector.broadcast %5 : vector<1x128xf32> to vector<8x128xf32>
    %7 = arith.addf %4, %6 : vector<8x128xf32>
    %cst_6 = arith.constant 0.000000e+00 : f32
    %8 = vector.broadcast %cst_6 : f32 to vector<8x128xf32>
    %9 = arith.cmpf ogt, %7, %8 : vector<8x128xf32>
    %cst_7 = arith.constant 0.00999999977 : f32
    %10 = vector.broadcast %cst_7 : f32 to vector<8x128xf32>
    %11 = arith.mulf %10, %7 : vector<8x128xf32>
    %12 = arith.select %9, %7, %11 : vector<8x128xi1>, vector<8x128xf32>
    %13 = arith.truncf %12 : vector<8x128xf32> to vector<8x128xbf16>
    %c0_8 = arith.constant 0 : index
    %c0_9 = arith.constant 0 : index
    %c0_10 = arith.constant 0 : index
    %14 = vector.load %arg3[%c0_8, %c0_9, %c0_10] : memref<2x128x128xbf16, #tpu.memory_space<vmem>>, vector<1x128x128xbf16>
    %15 = vector.shape_cast %14 : vector<1x128x128xbf16> to vector<128x128xbf16>
    %cst_11 = arith.constant dense<0.000000e+00> : vector<8x128xf32>
    %16 = tpu.matmul %13, %15, %cst_11 {dimension_numbers = #tpu.dot_dimension_numbers<[1], [0], [0], [1], [0, 0, 1, 1], [], []>} : vector<8x128xbf16>, vector<128x128xbf16>, vector<8x128xf32> -> vector<8x128xf32>
    %c1 = arith.constant 1 : index
    %c0_12 = arith.constant 0 : index
    %17 = vector.load %arg5[%c1, %c0_12] : memref<8x128xf32, #tpu.memory_space<vmem>>, vector<1x128xf32>
    %18 = vector.broadcast %17 : vector<1x128xf32> to vector<8x128xf32>
    %19 = arith.addf %16, %18 : vector<8x128xf32>
    %cst_13 = arith.constant 0.000000e+00 : f32
    %20 = vector.broadcast %cst_13 : f32 to vector<8x128xf32>
    %21 = arith.cmpf ogt, %19, %20 : vector<8x128xf32>
    %cst_14 = arith.constant 0.00999999977 : f32
    %22 = vector.broadcast %cst_14 : f32 to vector<8x128xf32>
    %23 = arith.mulf %22, %19 : vector<8x128xf32>
    %24 = arith.select %21, %19, %23 : vector<8x128xi1>, vector<8x128xf32>
    %25 = arith.truncf %24 : vector<8x128xf32> to vector<8x128xbf16>
    %c0_15 = arith.constant 0 : index
    %c0_16 = arith.constant 0 : index
    %c0_17 = arith.constant 0 : index
    %26 = vector.load %arg4[%c0_15, %c0_16, %c0_17] : memref<2x128x16xbf16, #tpu.memory_space<vmem>>, vector<1x128x16xbf16>
    %27 = vector.shape_cast %26 : vector<1x128x16xbf16> to vector<128x16xbf16>
    %cst_18 = arith.constant dense<0.000000e+00> : vector<8x16xf32>
    %28 = tpu.matmul %25, %27, %cst_18 {dimension_numbers = #tpu.dot_dimension_numbers<[1], [0], [0], [1], [0, 0, 1, 1], [], []>} : vector<8x128xbf16>, vector<128x16xbf16>, vector<8x16xf32> -> vector<8x16xf32>
    %c2 = arith.constant 2 : index
    %c0_19 = arith.constant 0 : index
    %29 = vector.load %arg5[%c2, %c0_19] : memref<8x128xf32, #tpu.memory_space<vmem>>, vector<1x16xf32>
    %30 = vector.broadcast %29 : vector<1x16xf32> to vector<8x16xf32>
    %31 = arith.addf %28, %30 : vector<8x16xf32>
    %32 = tpu.iota {dimensions = array<i32: 1>} : vector<8x16xi32>
    %c8_i32 = arith.constant 8 : i32
    %33 = vector.broadcast %c8_i32 : i32 to vector<8x16xi32>
    %34 = arith.cmpi sge, %32, %33 : vector<8x16xi32>
    %cst_20 = arith.constant 5.000000e-01 : f32
    %35 = vector.broadcast %cst_20 : f32 to vector<8x16xf32>
    %36 = arith.mulf %35, %31 : vector<8x16xf32>
    %37 = math.exp %36 : vector<8x16xf32>
    %38 = arith.mulf %0, %37 : vector<8x16xf32>
    %39 = arith.select %34, %31, %38 : vector<8x16xi1>, vector<8x16xf32>
    %40 = arith.truncf %39 : vector<8x16xf32> to vector<8x16xbf16>
    %c1_21 = arith.constant 1 : index
    %c0_22 = arith.constant 0 : index
    %c0_23 = arith.constant 0 : index
    %41 = vector.load %arg2[%c1_21, %c0_22, %c0_23] : memref<2x16x128xbf16, #tpu.memory_space<vmem>>, vector<1x16x128xbf16>
    %42 = vector.shape_cast %41 : vector<1x16x128xbf16> to vector<16x128xbf16>
    %cst_24 = arith.constant dense<0.000000e+00> : vector<8x128xf32>
    %43 = tpu.matmul %40, %42, %cst_24 {dimension_numbers = #tpu.dot_dimension_numbers<[1], [0], [0], [1], [0, 0, 1, 1], [], []>} : vector<8x16xbf16>, vector<16x128xbf16>, vector<8x128xf32> -> vector<8x128xf32>
    %c3 = arith.constant 3 : index
    %c0_25 = arith.constant 0 : index
    %44 = vector.load %arg5[%c3, %c0_25] : memref<8x128xf32, #tpu.memory_space<vmem>>, vector<1x128xf32>
    %45 = vector.broadcast %44 : vector<1x128xf32> to vector<8x128xf32>
    %46 = arith.addf %43, %45 : vector<8x128xf32>
    %cst_26 = arith.constant 0.000000e+00 : f32
    %47 = vector.broadcast %cst_26 : f32 to vector<8x128xf32>
    %48 = arith.cmpf ogt, %46, %47 : vector<8x128xf32>
    %cst_27 = arith.constant 0.00999999977 : f32
    %49 = vector.broadcast %cst_27 : f32 to vector<8x128xf32>
    %50 = arith.mulf %49, %46 : vector<8x128xf32>
    %51 = arith.select %48, %46, %50 : vector<8x128xi1>, vector<8x128xf32>
    %52 = arith.truncf %51 : vector<8x128xf32> to vector<8x128xbf16>
    %c1_28 = arith.constant 1 : index
    %c0_29 = arith.constant 0 : index
    %c0_30 = arith.constant 0 : index
    %53 = vector.load %arg3[%c1_28, %c0_29, %c0_30] : memref<2x128x128xbf16, #tpu.memory_space<vmem>>, vector<1x128x128xbf16>
    %54 = vector.shape_cast %53 : vector<1x128x128xbf16> to vector<128x128xbf16>
    %cst_31 = arith.constant dense<0.000000e+00> : vector<8x128xf32>
    %55 = tpu.matmul %52, %54, %cst_31 {dimension_numbers = #tpu.dot_dimension_numbers<[1], [0], [0], [1], [0, 0, 1, 1], [], []>} : vector<8x128xbf16>, vector<128x128xbf16>, vector<8x128xf32> -> vector<8x128xf32>
    %c4 = arith.constant 4 : index
    %c0_32 = arith.constant 0 : index
    %56 = vector.load %arg5[%c4, %c0_32] : memref<8x128xf32, #tpu.memory_space<vmem>>, vector<1x128xf32>
    %57 = vector.broadcast %56 : vector<1x128xf32> to vector<8x128xf32>
    %58 = arith.addf %55, %57 : vector<8x128xf32>
    %cst_33 = arith.constant 0.000000e+00 : f32
    %59 = vector.broadcast %cst_33 : f32 to vector<8x128xf32>
    %60 = arith.cmpf ogt, %58, %59 : vector<8x128xf32>
    %cst_34 = arith.constant 0.00999999977 : f32
    %61 = vector.broadcast %cst_34 : f32 to vector<8x128xf32>
    %62 = arith.mulf %61, %58 : vector<8x128xf32>
    %63 = arith.select %60, %58, %62 : vector<8x128xi1>, vector<8x128xf32>
    %64 = arith.truncf %63 : vector<8x128xf32> to vector<8x128xbf16>
    %c1_35 = arith.constant 1 : index
    %c0_36 = arith.constant 0 : index
    %c0_37 = arith.constant 0 : index
    %65 = vector.load %arg4[%c1_35, %c0_36, %c0_37] : memref<2x128x16xbf16, #tpu.memory_space<vmem>>, vector<1x128x16xbf16>
    %66 = vector.shape_cast %65 : vector<1x128x16xbf16> to vector<128x16xbf16>
    %cst_38 = arith.constant dense<0.000000e+00> : vector<8x16xf32>
    %67 = tpu.matmul %64, %66, %cst_38 {dimension_numbers = #tpu.dot_dimension_numbers<[1], [0], [0], [1], [0, 0, 1, 1], [], []>} : vector<8x128xbf16>, vector<128x16xbf16>, vector<8x16xf32> -> vector<8x16xf32>
    %c5 = arith.constant 5 : index
    %c0_39 = arith.constant 0 : index
    %68 = vector.load %arg5[%c5, %c0_39] : memref<8x128xf32, #tpu.memory_space<vmem>>, vector<1x16xf32>
    %69 = vector.broadcast %68 : vector<1x16xf32> to vector<8x16xf32>
    %70 = arith.addf %67, %69 : vector<8x16xf32>
    %71 = arith.addf %70, %31 : vector<8x16xf32>
    %c0_40 = arith.constant 0 : index
    %c0_41 = arith.constant 0 : index
    %72 = vector.load %arg6[%c0_40, %c0_41] : memref<8x16xf32, #tpu.memory_space<vmem>>, vector<8x16xf32>
    tpu.vector_store %arg6[%c0_40, %c0_41], %71 {strides = array<i32>} : memref<8x16xf32, #tpu.memory_space<vmem>>, vector<8x16xf32>,
    return
  }
  func.func @transform_0(%arg0: i32) -> (i32, i32) {
    %c0_i32 = arith.constant 0 : i32
    %c0_i32_0 = arith.constant 0 : i32
    return %arg0, %c0_i32 : i32, i32
  }
  func.func @transform_1(%arg0: i32) -> (i32, i32, i32) {
    %c0_i32 = arith.constant 0 : i32
    %c0_i32_0 = arith.constant 0 : i32
    %c0_i32_1 = arith.constant 0 : i32
    %c0_i32_2 = arith.constant 0 : i32
    return %c0_i32, %c0_i32_0, %c0_i32_1 : i32, i32, i32
  }
  func.func @transform_2(%arg0: i32) -> (i32, i32, i32) {
    %c0_i32 = arith.constant 0 : i32
    %c0_i32_0 = arith.constant 0 : i32
    %c0_i32_1 = arith.constant 0 : i32
    %c0_i32_2 = arith.constant 0 : i32
    return %c0_i32, %c0_i32_0, %c0_i32_1 : i32, i32, i32
  }
  func.func @transform_3(%arg0: i32) -> (i32, i32, i32) {
    %c0_i32 = arith.constant 0 : i32
    %c0_i32_0 = arith.constant 0 : i32
    %c0_i32_1 = arith.constant 0 : i32
    %c0_i32_2 = arith.constant 0 : i32
    return %c0_i32, %c0_i32_0, %c0_i32_1 : i32, i32, i32
  }
  func.func @transform_4(%arg0: i32) -> (i32, i32) {
    %c0_i32 = arith.constant 0 : i32
    %c0_i32_0 = arith.constant 0 : i32
    %c0_i32_1 = arith.constant 0 : i32
    return %c0_i32, %c0_i32_0 : i32, i32
  }
  func.func @transform_5(%arg0: i32) -> (i32, i32) {
    %c0_i32 = arith.constant 0 : i32
    %c0_i32_0 = arith.constant 0 : i32
    return %arg0, %c0_i32 : i32, i32
  }
}

</mosaic_0001>

<llo_original>
// kernel: tpu_custom_call.1
$region0: #{tpu_custom_call.1}
  #allocation0 [shape = 'u32[]', space=smem, size = 0x4, offset = 0x4, fixed_abs, tag = 'smem constant byte address 0x4 - core index']
  #allocation1 [shape = 'u32[144,128]{1,0:T(1,128)}', space=vmem, size = 0x12000, scoped, tag = 'internal scratch']
  %s0 = inlined_call_operand.vmem [shape: f32[16,16], index: 0, kind: input, shape index: {}]
  %s1 = inlined_call_operand.hbm [shape: bf16[2,16,128], index: 1, kind: input, shape index: {}]
  %s2 = inlined_call_operand.vmem [shape: bf16[2,128,128], index: 2, kind: input, shape index: {}]
  %s3 = inlined_call_operand.vmem [shape: bf16[2,128,16], index: 3, kind: input, shape index: {}]
  %s4 = inlined_call_operand.vmem [shape: f32[8,128], index: 4, kind: input, shape index: {}]
  %s5 = inlined_call_operand.hbm [shape: f32[16,16], index: 5, kind: output, shape index: {}]
  %s6 = sld [smem:[#allocation0]]
  $region57: #{tpu_custom_call.1} parent=0
    _
  %s8 = ssub.s32 1, %s6
  %s9 = scalar_select 0, %s8, %s6
  $region1: #{tpu_custom_call.1} parent=0
    #allocation2 [shape = 'u8[8192]{0}', space=vmem, size = 0x2000, scoped, tag = 'input window, operand 1, single buffered']
    #allocation3 [shape = 's32[2]{0}', space=sflag, size = 0x8, scoped, tag = 'scoped memory for tpu_custom_call.1']
    #allocation4 [shape = 's32[2]{0}', space=sflag, size = 0x8, scoped, tag = 'scoped memory for tpu_custom_call.1']
    #allocation5 [shape = 'u8[8192]{0}', space=vmem, size = 0x2000, scoped, tag = 'output window, operand 0']
    %10 = vsyncpa [#allocation3], 0
    %11 = vsyncpa [#allocation4], 0
    %s12 = scalar_lea.sflag [#allocation4], 1
    %13 = vsyncpa %s12, 0
    loop: start=0, step=1, limit=4
    $region2: #{tpu_custom_call.1} parent=1 // loop_pre_header
      _
    $region3: #{tpu_custom_call.1} parent=1 // loop_header
      %s15 = sphi 0, %s19
      %p16 = scmp.ge.s32.totalorder %s15, 4
      %s25 = sphi 0, %s27
      %s28 = sphi 0, %s25
      %s29 = sphi 0, %s28
      %s45 = sphi 0, %s29
      %s49 = sphi 0, %s49
      %s51 = sphi 0, %s49
      %s52 = sphi 0, %s51
      %s66 = sphi 0, %s52
      %s70 = sphi 0, %s70
      %s72 = sphi 0, %s70
      %s73 = sphi 0, %s72
      %s87 = sphi 0, %s73
      %s91 = sphi 0, %s91
      %s93 = sphi 0, %s91
      %s94 = sphi 0, %s93
      %s108 = sphi 0, %s94
      %s112 = sphi 0, %s112
      %s114 = sphi 0, %s112
      %s115 = sphi 0, %s114
      %s129 = sphi 0, %s115
      %s135 = sphi 0, %s137
      %s138 = sphi 0, %s135
      %s139 = sphi 0, %s138
      %s155 = sphi 0, %s139
    $region4: #{tpu_custom_call.1} parent=1 // loop_header_branch
      %18 = sbr.rel (%p16) target = $region8
    $region5: #{tpu_custom_call.1} parent=1 // loop_body
      %s20 = ssub.s32 %s15, 1
      %s21 = ssub.s32 %s15, 2
      %s22 = sadd.s32 %s15, 1
      %s23 = ssub.s32 %s15, %s22
      %p24 = scmp.eq.s32.totalorder %s23, 0
      %s26 = sadd.s32 %s25, 1
      %s27 = scalar_select %p24, %s25, %s26
      %p30 = pneg %p24
      %p31 = scmp.eq.s32.totalorder %s15, 1
      %p32 = por %p30, %p31
      %p33 = scmp.ne.s32.totalorder %s25, %s28
      %p34 = scmp.eq.s32.totalorder %s15, 0
      %p35 = por %p33, %p34
      %p36 = scmp.ne.s32.totalorder %s25, %s28
      %p37 = scmp.eq.s32.totalorder %s20, 1
      %p38 = por %p36, %p37
      %p39 = scmp.ne.s32.totalorder %s28, %s29
      %p40 = scmp.eq.s32.totalorder %s20, 0
      %p41 = por %p39, %p40
      %p42 = scmp.ne.s32.totalorder %s28, %s29
      %p43 = scmp.eq.s32.totalorder %s21, 1
      %p44 = por %p42, %p43
      %p46 = scmp.ne.s32.totalorder %s29, %s45
      %p47 = scmp.eq.s32.totalorder %s21, 0
      %p48 = por %p46, %p47
      %s50 = sadd.s32 %s49, 1
      %p53 = scmp.eq.s32.totalorder %s15, 1
      %p54 = scmp.ne.s32.totalorder %s49, %s51
      %p55 = scmp.eq.s32.totalorder %s15, 0
      %p56 = por %p54, %p55
      %p57 = scmp.ne.s32.totalorder %s49, %s51
      %p58 = scmp.eq.s32.totalorder %s20, 1
      %p59 = por %p57, %p58
      %p60 = scmp.ne.s32.totalorder %s51, %s52
      %p61 = scmp.eq.s32.totalorder %s20, 0
      %p62 = por %p60, %p61
      %p63 = scmp.ne.s32.totalorder %s51, %s52
      %p64 = scmp.eq.s32.totalorder %s21, 1
      %p65 = por %p63, %p64
      %p67 = scmp.ne.s32.totalorder %s52, %s66
      %p68 = scmp.eq.s32.totalorder %s21, 0
      %p69 = por %p67, %p68
      %s71 = sadd.s32 %s70, 1
      %p74 = scmp.eq.s32.totalorder %s15, 1
      %p75 = scmp.ne.s32.totalorder %s70, %s72
      %p76 = scmp.eq.s32.totalorder %s15, 0
      %p77 = por %p75, %p76
      %p78 = scmp.ne.s32.totalorder %s70, %s72
      %p79 = scmp.eq.s32.totalorder %s20, 1
      %p80 = por %p78, %p79
      %p81 = scmp.ne.s32.totalorder %s72, %s73
      %p82 = scmp.eq.s32.totalorder %s20, 0
      %p83 = por %p81, %p82
      %p84 = scmp.ne.s32.totalorder %s72, %s73
      %p85 = scmp.eq.s32.totalorder %s21, 1
      %p86 = por %p84, %p85
      %p88 = scmp.ne.s32.totalorder %s73, %s87
      %p89 = scmp.eq.s32.totalorder %s21, 0
      %p90 = por %p88, %p89
      %s92 = sadd.s32 %s91, 1
      %p95 = scmp.eq.s32.totalorder %s15, 1
      %p96 = scmp.ne.s32.totalorder %s91, %s93
      %p97 = scmp.eq.s32.totalorder %s15, 0
      %p98 = por %p96, %p97
      %p99 = scmp.ne.s32.totalorder %s91, %s93
      %p100 = scmp.eq.s32.totalorder %s20, 1
      %p101 = por %p99, %p100
      %p102 = scmp.ne.s32.totalorder %s93, %s94
      %p103 = scmp.eq.s32.totalorder %s20, 0
      %p104 = por %p102, %p103
      %p105 = scmp.ne.s32.totalorder %s93, %s94
      %p106 = scmp.eq.s32.totalorder %s21, 1
      %p107 = por %p105, %p106
      %p109 = scmp.ne.s32.totalorder %s94, %s108
      %p110 = scmp.eq.s32.totalorder %s21, 0
      %p111 = por %p109, %p110
      %s113 = sadd.s32 %s112, 1
      %p116 = scmp.eq.s32.totalorder %s15, 1
      %p117 = scmp.ne.s32.totalorder %s112, %s114
      %p118 = scmp.eq.s32.totalorder %s15, 0
      %p119 = por %p117, %p118
      %p120 = scmp.ne.s32.totalorder %s112, %s114
      %p121 = scmp.eq.s32.totalorder %s20, 1
      %p122 = por %p120, %p121
      %p123 = scmp.ne.s32.totalorder %s114, %s115
      %p124 = scmp.eq.s32.totalorder %s20, 0
      %p125 = por %p123, %p124
      %p126 = scmp.ne.s32.totalorder %s114, %s115
      %p127 = scmp.eq.s32.totalorder %s21, 1
      %p128 = por %p126, %p127
      %p130 = scmp.ne.s32.totalorder %s115, %s129
      %p131 = scmp.eq.s32.totalorder %s21, 0
      %p132 = por %p130, %p131
      %s133 = ssub.s32 %s15, %s22
      %p134 = scmp.eq.s32.totalorder %s133, 0
      %s136 = sadd.s32 %s135, 1
      %s137 = scalar_select %p134, %s135, %s136
      %p140 = pneg %p134
      %p141 = scmp.eq.s32.totalorder %s15, 1
      %p142 = por %p140, %p141
      %p143 = scmp.ne.s32.totalorder %s135, %s138
      %p144 = scmp.eq.s32.totalorder %s15, 0
      %p145 = por %p143, %p144
      %p146 = scmp.ne.s32.totalorder %s135, %s138
      %p147 = scmp.eq.s32.totalorder %s20, 1
      %p148 = por %p146, %p147
      %p149 = scmp.ne.s32.totalorder %s138, %s139
      %p150 = scmp.eq.s32.totalorder %s20, 0
      %p151 = por %p149, %p150
      %p152 = scmp.ne.s32.totalorder %s138, %s139
      %p153 = scmp.eq.s32.totalorder %s21, 1
      %p154 = por %p152, %p153
      %p156 = scmp.ne.s32.totalorder %s139, %s155
      %p157 = scmp.eq.s32.totalorder %s21, 0
      %p158 = por %p156, %p157
      %p159 = scmp.le.s32.totalorder 1, %s15
      %p160 = scmp.lt.s32.totalorder %s15, 3
      %p161 = pnand %p159, %p160
      %p162 = pneg %p161
      // Predicated region
      $region9: #{tpu_custom_call.1} parent=5 // pred_check
        _
      $region10: #{tpu_custom_call.1} parent=5 // pred_check_branch
        %164 = sbr.rel (%p161) target = $region12
      $region11: #{tpu_custom_call.1} parent=5 // pred_region
        %s165 = ssub.s32 %s15, 1
        // Predicated region
        $region13: #{tpu_custom_call.1} parent=11 // pred_check
          %p166 = pneg %p62
        $region14: #{tpu_custom_call.1} parent=11 // pred_check_branch
          %168 = sbr.rel (%p166) target = $region16
        $region15: #{tpu_custom_call.1} parent=11 // pred_region
          %s170 = ssub.s32 256, 256
          %171 = vsyncadd [#allocation3], %s170
          %s172 = sshll.u32 [#allocation2], 4
          %s173 = int_to_ptr.vmem [resolvable:$true] %s172
          %178 = dma.hbm_to_vmem [thread:$0]  %s1, 256, %s173, [#allocation3], 64, 64, 4
        $region16: #{tpu_custom_call.1} parent=11 // pred_fallthru
          _
        // Predicated region
        $region17: #{tpu_custom_call.1} parent=11 // pred_check
          %p179 = pneg %p83
        $region18: #{tpu_custom_call.1} parent=11 // pred_check_branch
          %181 = sbr.rel (%p179) target = $region20
        $region19: #{tpu_custom_call.1} parent=11 // pred_region
          _
        $region20: #{tpu_custom_call.1} parent=11 // pred_fallthru
          _
        // Predicated region
        $region21: #{tpu_custom_call.1} parent=11 // pred_check
          %p182 = pneg %p104
        $region22: #{tpu_custom_call.1} parent=11 // pred_check_branch
          %184 = sbr.rel (%p182) target = $region24
        $region23: #{tpu_custom_call.1} parent=11 // pred_region
          _
        $region24: #{tpu_custom_call.1} parent=11 // pred_fallthru
          _
        // Predicated region
        $region25: #{tpu_custom_call.1} parent=11 // pred_check
          %p185 = pneg %p125
        $region26: #{tpu_custom_call.1} parent=11 // pred_check_branch
          %187 = sbr.rel (%p185) target = $region28
        $region27: #{tpu_custom_call.1} parent=11 // pred_region
          _
        $region28: #{tpu_custom_call.1} parent=11 // pred_fallthru
          _
      $region12: #{tpu_custom_call.1} parent=5 // pred_fallthru
        _
      %p188 = scmp.lt.s32.totalorder %s15, 2
      // Predicated region
      $region29: #{tpu_custom_call.1} parent=5 // pred_check
        %p189 = pneg %p188
      $region30: #{tpu_custom_call.1} parent=5 // pred_check_branch
        %191 = sbr.rel (%p189) target = $region32
      $region31: #{tpu_custom_call.1} parent=5 // pred_region
        // Predicated region
        $region33: #{tpu_custom_call.1} parent=31 // pred_check
          %p192 = pneg %p35
        $region34: #{tpu_custom_call.1} parent=31 // pred_check_branch
          %194 = sbr.rel (%p192) target = $region36
        $region35: #{tpu_custom_call.1} parent=31 // pred_region
          %p195 = scmp.lt.s32.totalorder %s15, 1
          %s196 = scalar_select %p195, %s15, 1
          %s197 = smul.addr %s196, 8
          %s198 = scalar_lea.vmem %s0, %s197
        $region36: #{tpu_custom_call.1} parent=31 // pred_fallthru
          _
      $region32: #{tpu_custom_call.1} parent=5 // pred_fallthru
        _
      %p199 = scmp.le.s32.totalorder 1, %s15
      %p200 = scmp.lt.s32.totalorder %s15, 3
      %p201 = pnand %p199, %p200
      %p202 = pneg %p201
      // Predicated region
      $region37: #{tpu_custom_call.1} parent=5 // pred_check
        _
      $region38: #{tpu_custom_call.1} parent=5 // pred_check_branch
        %204 = sbr.rel (%p201) target = $region40
      $region39: #{tpu_custom_call.1} parent=5 // pred_region
        %s205 = ssub.s32 %s15, 1
        // Predicated region
        $region41: #{tpu_custom_call.1} parent=39 // pred_check
          %p206 = pneg %p62
        $region42: #{tpu_custom_call.1} parent=39 // pred_check_branch
          %208 = sbr.rel (%p206) target = $region44
        $region43: #{tpu_custom_call.1} parent=39 // pred_region
          %209 = dma.done [#allocation3], 256
        $region44: #{tpu_custom_call.1} parent=39 // pred_fallthru
          _
        %p210 = scmp.lt.s32.totalorder %s20, 1
        %s211 = scalar_select %p210, %s20, 1
        %s212 = smul.addr %s211, 8
        %s213 = scalar_lea.vmem %s0, %s212
        %p214 = pneg %p41
        %p215 = pneg %p38
        %p216 = pneg %p62
        %p217 = pneg %p59
        %p218 = pneg %p83
        %p219 = pneg %p80
        %p220 = pneg %p104
        %p221 = pneg %p101
        %p222 = pneg %p125
        %p223 = pneg %p122
        %p224 = pneg %p151
        %p225 = pneg %p148
        %s226 = sand.u32 %s138, 1
        %s227 = scalar_lea.sflag [#allocation4], %s226
        %s228 = sand.u32 %s138, 1
        %s229 = smul.addr %s228, 8
        %s230 = scalar_lea.vmem [#allocation5], %s229
        %p231 = scmp.lt.s32.totalorder %s20, 1
        %s232 = scalar_select %p231, %s20, 1
        %s233 = smul.addr %s232, 8
        %s234 = scalar_lea.vmem %s0, %s233
        %v236 = vld [vmem:[%s234] sm:$0xff]
        %v237 = vpack.c.bf16 %v236, %v236
        %v238 = vld [vmem:[#allocation2] sm:$0xf]
        %v239 = vld [vmem:[#allocation2 + $0x4] sm:$0xf]
        %v240 = vld [vmem:[%s4] sm:$0x1]
        %v241 = vlaneseq
        %v242 = vshrl.u32 %v241, 7
        %v243 = vsub.s32 0, %v242
        %v244 = vrot.slane %v240, %v243
        %v247 = vunpack.c.l.b16 %v238
        %v248 = vunpack.c.l.b16 %v239
        %v249 = vpack.c.b16 %v248, %v247
        %vm251 = vcmask 130048
        %v253 = vsel %vm251, %v237, 0
        %255 = vmatprep.subr.bf16.mxu0 0
        %256 = vmatpush1.bf16.msra.mxu0 %v249
        %257 = vmatprep.subr.bf16.mxu0 0
        %258 = vmatpush1.bf16.msra.mxu0 0
        %259 = vmatprep.subr.bf16.mxu0 0
        %260 = vmatpush1.bf16.msra.mxu0 0
        %261 = vmatprep.subr.bf16.mxu0 0
        %262 = vmatpush1.bf16.msra.mxu0 0
        %263 = vmatprep.subr.bf16.mxu0 0
        %264 = vmatpush1.bf16.msra.mxu0 0
        %265 = vmatprep.subr.bf16.mxu0 0
        %266 = vmatpush1.bf16.msra.mxu0 0
        %267 = vmatprep.subr.bf16.mxu0 0
        %268 = vmatpush1.bf16.msra.mxu0 0
        %269 = vmatprep.subr.bf16.mxu0 0
        %270 = vmatpush1.bf16.msra.mxu0 0
        %271 = vmatprep.subr.bf16.mxu0 0
        %272 = vmatpush1.bf16.msra.mxu0 0
        %273 = vmatprep.subr.bf16.mxu0 0
        %274 = vmatpush1.bf16.msra.mxu0 0
        %275 = vmatprep.subr.bf16.mxu0 0
        %276 = vmatpush1.bf16.msra.mxu0 0
        %277 = vmatprep.subr.bf16.mxu0 0
        %278 = vmatpush1.bf16.msra.mxu0 0
        %279 = vmatprep.subr.bf16.mxu0 0
        %280 = vmatpush1.bf16.msra.mxu0 0
        %281 = vmatprep.subr.bf16.mxu0 0
        %282 = vmatpush1.bf16.msra.mxu0 0
        %283 = vmatprep.subr.bf16.mxu0 0
        %284 = vmatpush1.bf16.msra.mxu0 0
        %285 = vmatprep.subr.bf16.mxu0 0
        %286 = vmatpush1.bf16.msra.mxu0 0
        %287 = vmatprep.mubr.bf16.mxu0 0
        %288 = vmatmul.mubr.bf16.gmra.mrb[0].mxu0 %v253
        %v289 = vpop.f32.mrb[0].mxu0
        %v290 = vadd.f32 %v244, %v289
        %v291 = vpop.f32.mrb[0].mxu0
        %v292 = vpop.f32.mrb[0].mxu0
        %v293 = vpop.f32.mrb[0].mxu0
        %294 = vdwg.mxu0
        %vm295 = vcmp.gt.f32.partialorder %v290, 0.0
        %v296 = vmul.f32 %v290, 0.01
        %v297 = vsel %vm295, %v290, %v296
        %v298 = vpack.c.bf16 %v297, %v297
        %v299 = vld [vmem:[%s2] sm:$0xf]
        %v300 = vld [vmem:[%s2 + $0x4] sm:$0xf]
        %v301 = vld [vmem:[%s2 + $0x8] sm:$0xf]
        %v302 = vld [vmem:[%s2 + $0xc] sm:$0xf]
        %v303 = vld [vmem:[%s2 + $0x10] sm:$0xf]
        %v304 = vld [vmem:[%s2 + $0x14] sm:$0xf]
        %v305 = vld [vmem:[%s2 + $0x18] sm:$0xf]
        %v306 = vld [vmem:[%s2 + $0x1c] sm:$0xf]
        %v307 = vld [vmem:[%s2 + $0x20] sm:$0xf]
        %v308 = vld [vmem:[%s2 + $0x24] sm:$0xf]
        %v309 = vld [vmem:[%s2 + $0x28] sm:$0xf]
        %v310 = vld [vmem:[%s2 + $0x2c] sm:$0xf]
        %v311 = vld [vmem:[%s2 + $0x30] sm:$0xf]
        %v312 = vld [vmem:[%s2 + $0x34] sm:$0xf]
        %v313 = vld [vmem:[%s2 + $0x38] sm:$0xf]
        %v314 = vld [vmem:[%s2 + $0x3c] sm:$0xf]
        %v315 = vld [vmem:[%s4 + $0x1] sm:$0x1]
        %v316 = vlaneseq
        %v317 = vshrl.u32 %v316, 7
        %v318 = vsub.s32 0, %v317
        %v319 = vrot.slane %v315, %v318
        %v336 = vunpack.c.l.b16 %v299
        %v337 = vunpack.c.l.b16 %v300
        %v338 = vunpack.c.l.b16 %v301
        %v339 = vunpack.c.l.b16 %v302
        %v340 = vunpack.c.l.b16 %v303
        %v341 = vunpack.c.l.b16 %v304
        %v342 = vunpack.c.l.b16 %v305
        %v343 = vunpack.c.l.b16 %v306
        %v344 = vunpack.c.l.b16 %v307
        %v345 = vunpack.c.l.b16 %v308
        %v346 = vunpack.c.l.b16 %v309
        %v347 = vunpack.c.l.b16 %v310
        %v348 = vunpack.c.l.b16 %v311
        %v349 = vunpack.c.l.b16 %v312
        %v350 = vunpack.c.l.b16 %v313
        %v351 = vunpack.c.l.b16 %v314
        %v352 = vpack.c.b16 %v337, %v336
        %v353 = vpack.c.b16 %v339, %v338
        %v354 = vpack.c.b16 %v341, %v340
        %v355 = vpack.c.b16 %v343, %v342
        %v356 = vpack.c.b16 %v345, %v344
        %v357 = vpack.c.b16 %v347, %v346
        %v358 = vpack.c.b16 %v349, %v348
        %v359 = vpack.c.b16 %v351, %v350
        %368 = vmatprep.subr.bf16.mxu0 0
        %369 = vmatpush1.bf16.msra.mxu0 %v352
        %370 = vmatprep.subr.bf16.mxu0 0
        %371 = vmatpush1.bf16.msra.mxu0 %v353
        %372 = vmatprep.subr.bf16.mxu0 0
        %373 = vmatpush1.bf16.msra.mxu0 %v354
        %374 = vmatprep.subr.bf16.mxu0 0
        %375 = vmatpush1.bf16.msra.mxu0 %v355
        %376 = vmatprep.subr.bf16.mxu0 0
        %377 = vmatpush1.bf16.msra.mxu0 %v356
        %378 = vmatprep.subr.bf16.mxu0 0
        %379 = vmatpush1.bf16.msra.mxu0 %v357
        %380 = vmatprep.subr.bf16.mxu0 0
        %381 = vmatpush1.bf16.msra.mxu0 %v358
        %382 = vmatprep.subr.bf16.mxu0 0
        %383 = vmatpush1.bf16.msra.mxu0 %v359
        %384 = vmatprep.subr.bf16.mxu0 0
        %385 = vmatpush1.bf16.msra.mxu0 0
        %386 = vmatprep.subr.bf16.mxu0 0
        %387 = vmatpush1.bf16.msra.mxu0 0
        %388 = vmatprep.subr.bf16.mxu0 0
        %389 = vmatpush1.bf16.msra.mxu0 0
        %390 = vmatprep.subr.bf16.mxu0 0
        %391 = vmatpush1.bf16.msra.mxu0 0
        %392 = vmatprep.subr.bf16.mxu0 0
        %393 = vmatpush1.bf16.msra.mxu0 0
        %394 = vmatprep.subr.bf16.mxu0 0
        %395 = vmatpush1.bf16.msra.mxu0 0
        %396 = vmatprep.subr.bf16.mxu0 0
        %397 = vmatpush1.bf16.msra.mxu0 0
        %398 = vmatprep.subr.bf16.mxu0 0
        %399 = vmatpush1.bf16.msra.mxu0 0
        %400 = vmatprep.mubr.bf16.mxu0 0
        %401 = vmatmul.mubr.bf16.gmra.mrb[0].mxu0 %v298
        %v402 = vpop.f32.mrb[0].mxu0
        %v403 = vadd.f32 %v319, %v402
        %v404 = vpop.f32.mrb[0].mxu0
        %v405 = vpop.f32.mrb[0].mxu0
        %v406 = vpop.f32.mrb[0].mxu0
        %407 = vdwg.mxu0
        %vm408 = vcmp.gt.f32.partialorder %v403, 0.0
        %v409 = vmul.f32 %v403, 0.01
        %v410 = vsel %vm408, %v403, %v409
        %v411 = vpack.c.bf16 %v410, %v410
        %v412 = vld [vmem:[%s3] sm:$0xf]
        %v413 = vld [vmem:[%s3 + $0x4] sm:$0xf]
        %v414 = vld [vmem:[%s3 + $0x8] sm:$0xf]
        %v415 = vld [vmem:[%s3 + $0xc] sm:$0xf]
        %v416 = vld [vmem:[%s3 + $0x10] sm:$0xf]
        %v417 = vld [vmem:[%s3 + $0x14] sm:$0xf]
        %v418 = vld [vmem:[%s3 + $0x18] sm:$0xf]
        %v419 = vld [vmem:[%s3 + $0x1c] sm:$0xf]
        %v420 = vld [vmem:[%s3 + $0x20] sm:$0xf]
        %v421 = vld [vmem:[%s3 + $0x24] sm:$0xf]
        %v422 = vld [vmem:[%s3 + $0x28] sm:$0xf]
        %v423 = vld [vmem:[%s3 + $0x2c] sm:$0xf]
        %v424 = vld [vmem:[%s3 + $0x30] sm:$0xf]
        %v425 = vld [vmem:[%s3 + $0x34] sm:$0xf]
        %v426 = vld [vmem:[%s3 + $0x38] sm:$0xf]
        %v427 = vld [vmem:[%s3 + $0x3c] sm:$0xf]
        %v428 = vld [vmem:[%s4 + $0x2] sm:$0x1]
        %v429 = vlaneseq
        %v430 = vshrl.u32 %v429, 7
        %v431 = vsub.s32 0, %v430
        %v432 = vrot.slane %v428, %v431
        %v449 = vunpack.c.l.b16 %v412
        %v450 = vunpack.c.l.b16 %v413
        %v451 = vunpack.c.l.b16 %v414
        %v452 = vunpack.c.l.b16 %v415
        %v453 = vunpack.c.l.b16 %v416
        %v454 = vunpack.c.l.b16 %v417
        %v455 = vunpack.c.l.b16 %v418
        %v456 = vunpack.c.l.b16 %v419
        %v457 = vunpack.c.l.b16 %v420
        %v458 = vunpack.c.l.b16 %v421
        %v459 = vunpack.c.l.b16 %v422
        %v460 = vunpack.c.l.b16 %v423
        %v461 = vunpack.c.l.b16 %v424
        %v462 = vunpack.c.l.b16 %v425
        %v463 = vunpack.c.l.b16 %v426
        %v464 = vunpack.c.l.b16 %v427
        %v465 = vpack.c.b16 %v450, %v449
        %v466 = vpack.c.b16 %v452, %v451
        %v467 = vpack.c.b16 %v454, %v453
        %v468 = vpack.c.b16 %v456, %v455
        %v469 = vpack.c.b16 %v458, %v457
        %v470 = vpack.c.b16 %v460, %v459
        %v471 = vpack.c.b16 %v462, %v461
        %v472 = vpack.c.b16 %v464, %v463
        %481 = vmatprep.subr.bf16.mxu0 0
        %482 = vmatpush1.bf16.msra.mxu0 %v465
        %483 = vmatprep.subr.bf16.mxu0 0
        %484 = vmatpush1.bf16.msra.mxu0 %v466
        %485 = vmatprep.subr.bf16.mxu0 0
        %486 = vmatpush1.bf16.msra.mxu0 %v467
        %487 = vmatprep.subr.bf16.mxu0 0
        %488 = vmatpush1.bf16.msra.mxu0 %v468
        %489 = vmatprep.subr.bf16.mxu0 0
        %490 = vmatpush1.bf16.msra.mxu0 %v469
        %491 = vmatprep.subr.bf16.mxu0 0
        %492 = vmatpush1.bf16.msra.mxu0 %v470
        %493 = vmatprep.subr.bf16.mxu0 0
        %494 = vmatpush1.bf16.msra.mxu0 %v471
        %495 = vmatprep.subr.bf16.mxu0 0
        %496 = vmatpush1.bf16.msra.mxu0 %v472
        %497 = vmatprep.subr.bf16.mxu0 0
        %498 = vmatpush1.bf16.msra.mxu0 0
        %499 = vmatprep.subr.bf16.mxu0 0
        %500 = vmatpush1.bf16.msra.mxu0 0
        %501 = vmatprep.subr.bf16.mxu0 0
        %502 = vmatpush1.bf16.msra.mxu0 0
        %503 = vmatprep.subr.bf16.mxu0 0
        %504 = vmatpush1.bf16.msra.mxu0 0
        %505 = vmatprep.subr.bf16.mxu0 0
        %506 = vmatpush1.bf16.msra.mxu0 0
        %507 = vmatprep.subr.bf16.mxu0 0
        %508 = vmatpush1.bf16.msra.mxu0 0
        %509 = vmatprep.subr.bf16.mxu0 0
        %510 = vmatpush1.bf16.msra.mxu0 0
        %511 = vmatprep.subr.bf16.mxu0 0
        %512 = vmatpush1.bf16.msra.mxu0 0
        %513 = vmatprep.mubr.bf16.mxu0 0
        %514 = vmatmul.mubr.bf16.gmra.mrb[0].mxu0 %v411
        %v515 = vpop.f32.mrb[0].mxu0
        %v516 = vadd.f32 %v432, %v515
        %v517 = vpop.f32.mrb[0].mxu0
        %v518 = vpop.f32.mrb[0].mxu0
        %v519 = vpop.f32.mrb[0].mxu0
        %520 = vdwg.mxu0
        %v521 = vlaneseq
        %v522 = vand.u32 %v521, 127
        %vm523 = vcmp.ge.s32.totalorder %v522, 8
        %v524 = vmul.f32 %v516, 0.5
        %v525 = vmul.f32 %v524, 1.442695
        %v526 = vpow.pop %v525
        %v527 = vmul.f32 %v236, %v526
        %v528 = vsel %vm523, %v516, %v527
        %v529 = vpack.c.bf16 %v528, %v528
        %s530 = scalar_lea.vmem [#allocation2], 8
        %v531 = vld [vmem:[%s530] sm:$0xf]
        %v532 = vld [vmem:[%s530 + $0x4] sm:$0xf]
        %v533 = vld [vmem:[%s4 + $0x3] sm:$0x1]
        %v534 = vlaneseq
        %v535 = vshrl.u32 %v534, 7
        %v536 = vsub.s32 0, %v535
        %v537 = vrot.slane %v533, %v536
        %v540 = vunpack.c.l.b16 %v531
        %v541 = vunpack.c.l.b16 %v532
        %v542 = vpack.c.b16 %v541, %v540
        %v545 = vsel %vm251, %v529, 0
        %547 = vmatprep.subr.bf16.mxu0 0
        %548 = vmatpush1.bf16.msra.mxu0 %v542
        %549 = vmatprep.subr.bf16.mxu0 0
        %550 = vmatpush1.bf16.msra.mxu0 0
        %551 = vmatprep.subr.bf16.mxu0 0
        %552 = vmatpush1.bf16.msra.mxu0 0
        %553 = vmatprep.subr.bf16.mxu0 0
        %554 = vmatpush1.bf16.msra.mxu0 0
        %555 = vmatprep.subr.bf16.mxu0 0
        %556 = vmatpush1.bf16.msra.mxu0 0
        %557 = vmatprep.subr.bf16.mxu0 0
        %558 = vmatpush1.bf16.msra.mxu0 0
        %559 = vmatprep.subr.bf16.mxu0 0
        %560 = vmatpush1.bf16.msra.mxu0 0
        %561 = vmatprep.subr.bf16.mxu0 0
        %562 = vmatpush1.bf16.msra.mxu0 0
        %563 = vmatprep.subr.bf16.mxu0 0
        %564 = vmatpush1.bf16.msra.mxu0 0
        %565 = vmatprep.subr.bf16.mxu0 0
        %566 = vmatpush1.bf16.msra.mxu0 0
        %567 = vmatprep.subr.bf16.mxu0 0
        %568 = vmatpush1.bf16.msra.mxu0 0
        %569 = vmatprep.subr.bf16.mxu0 0
        %570 = vmatpush1.bf16.msra.mxu0 0
        %571 = vmatprep.subr.bf16.mxu0 0
        %572 = vmatpush1.bf16.msra.mxu0 0
        %573 = vmatprep.subr.bf16.mxu0 0
        %574 = vmatpush1.bf16.msra.mxu0 0
        %575 = vmatprep.subr.bf16.mxu0 0
        %576 = vmatpush1.bf16.msra.mxu0 0
        %577 = vmatprep.subr.bf16.mxu0 0
        %578 = vmatpush1.bf16.msra.mxu0 0
        %579 = vmatprep.mubr.bf16.mxu0 0
        %580 = vmatmul.mubr.bf16.gmra.mrb[0].mxu0 %v545
        %v581 = vpop.f32.mrb[0].mxu0
        %v582 = vadd.f32 %v537, %v581
        %v583 = vpop.f32.mrb[0].mxu0
        %v584 = vpop.f32.mrb[0].mxu0
        %v585 = vpop.f32.mrb[0].mxu0
        %586 = vdwg.mxu0
        %vm587 = vcmp.gt.f32.partialorder %v582, 0.0
        %v588 = vmul.f32 %v582, 0.01
        %v589 = vsel %vm587, %v582, %v588
        %v590 = vpack.c.bf16 %v589, %v589
        %s591 = scalar_lea.vmem %s2, 64
        %v592 = vld [vmem:[%s591] sm:$0xf]
        %v593 = vld [vmem:[%s591 + $0x4] sm:$0xf]
        %v594 = vld [vmem:[%s591 + $0x8] sm:$0xf]
        %v595 = vld [vmem:[%s591 + $0xc] sm:$0xf]
        %v596 = vld [vmem:[%s591 + $0x10] sm:$0xf]
        %v597 = vld [vmem:[%s591 + $0x14] sm:$0xf]
        %v598 = vld [vmem:[%s591 + $0x18] sm:$0xf]
        %v599 = vld [vmem:[%s591 + $0x1c] sm:$0xf]
        %v600 = vld [vmem:[%s591 + $0x20] sm:$0xf]
        %v601 = vld [vmem:[%s591 + $0x24] sm:$0xf]
        %v602 = vld [vmem:[%s591 + $0x28] sm:$0xf]
        %v603 = vld [vmem:[%s591 + $0x2c] sm:$0xf]
        %v604 = vld [vmem:[%s591 + $0x30] sm:$0xf]
        %v605 = vld [vmem:[%s591 + $0x34] sm:$0xf]
        %v606 = vld [vmem:[%s591 + $0x38] sm:$0xf]
        %v607 = vld [vmem:[%s591 + $0x3c] sm:$0xf]
        %v608 = vld [vmem:[%s4 + $0x4] sm:$0x1]
        %v609 = vlaneseq
        %v610 = vshrl.u32 %v609, 7
        %v611 = vsub.s32 0, %v610
        %v612 = vrot.slane %v608, %v611
        %v629 = vunpack.c.l.b16 %v592
        %v630 = vunpack.c.l.b16 %v593
        %v631 = vunpack.c.l.b16 %v594
        %v632 = vunpack.c.l.b16 %v595
        %v633 = vunpack.c.l.b16 %v596
        %v634 = vunpack.c.l.b16 %v597
        %v635 = vunpack.c.l.b16 %v598
        %v636 = vunpack.c.l.b16 %v599
        %v637 = vunpack.c.l.b16 %v600
        %v638 = vunpack.c.l.b16 %v601
        %v639 = vunpack.c.l.b16 %v602
        %v640 = vunpack.c.l.b16 %v603
        %v641 = vunpack.c.l.b16 %v604
        %v642 = vunpack.c.l.b16 %v605
        %v643 = vunpack.c.l.b16 %v606
        %v644 = vunpack.c.l.b16 %v607
        %v645 = vpack.c.b16 %v630, %v629
        %v646 = vpack.c.b16 %v632, %v631
        %v647 = vpack.c.b16 %v634, %v633
        %v648 = vpack.c.b16 %v636, %v635
        %v649 = vpack.c.b16 %v638, %v637
        %v650 = vpack.c.b16 %v640, %v639
        %v651 = vpack.c.b16 %v642, %v641
        %v652 = vpack.c.b16 %v644, %v643
        %661 = vmatprep.subr.bf16.mxu0 0
        %662 = vmatpush1.bf16.msra.mxu0 %v645
        %663 = vmatprep.subr.bf16.mxu0 0
        %664 = vmatpush1.bf16.msra.mxu0 %v646
        %665 = vmatprep.subr.bf16.mxu0 0
        %666 = vmatpush1.bf16.msra.mxu0 %v647
        %667 = vmatprep.subr.bf16.mxu0 0
        %668 = vmatpush1.bf16.msra.mxu0 %v648
        %669 = vmatprep.subr.bf16.mxu0 0
        %670 = vmatpush1.bf16.msra.mxu0 %v649
        %671 = vmatprep.subr.bf16.mxu0 0
        %672 = vmatpush1.bf16.msra.mxu0 %v650
        %673 = vmatprep.subr.bf16.mxu0 0
        %674 = vmatpush1.bf16.msra.mxu0 %v651
        %675 = vmatprep.subr.bf16.mxu0 0
        %676 = vmatpush1.bf16.msra.mxu0 %v652
        %677 = vmatprep.subr.bf16.mxu0 0
        %678 = vmatpush1.bf16.msra.mxu0 0
        %679 = vmatprep.subr.bf16.mxu0 0
        %680 = vmatpush1.bf16.msra.mxu0 0
        %681 = vmatprep.subr.bf16.mxu0 0
        %682 = vmatpush1.bf16.msra.mxu0 0
        %683 = vmatprep.subr.bf16.mxu0 0
        %684 = vmatpush1.bf16.msra.mxu0 0
        %685 = vmatprep.subr.bf16.mxu0 0
        %686 = vmatpush1.bf16.msra.mxu0 0
        %687 = vmatprep.subr.bf16.mxu0 0
        %688 = vmatpush1.bf16.msra.mxu0 0
        %689 = vmatprep.subr.bf16.mxu0 0
        %690 = vmatpush1.bf16.msra.mxu0 0
        %691 = vmatprep.subr.bf16.mxu0 0
        %692 = vmatpush1.bf16.msra.mxu0 0
        %693 = vmatprep.mubr.bf16.mxu0 0
        %694 = vmatmul.mubr.bf16.gmra.mrb[0].mxu0 %v590
        %v695 = vpop.f32.mrb[0].mxu0
        %v696 = vadd.f32 %v612, %v695
        %v697 = vpop.f32.mrb[0].mxu0
        %v698 = vpop.f32.mrb[0].mxu0
        %v699 = vpop.f32.mrb[0].mxu0
        %700 = vdwg.mxu0
        %vm701 = vcmp.gt.f32.partialorder %v696, 0.0
        %v702 = vmul.f32 %v696, 0.01
        %v703 = vsel %vm701, %v696, %v702
        %v704 = vpack.c.bf16 %v703, %v703
        %s705 = scalar_lea.vmem %s3, 64
        %v706 = vld [vmem:[%s705] sm:$0xf]
        %v707 = vld [vmem:[%s705 + $0x4] sm:$0xf]
        %v708 = vld [vmem:[%s705 + $0x8] sm:$0xf]
        %v709 = vld [vmem:[%s705 + $0xc] sm:$0xf]
        %v710 = vld [vmem:[%s705 + $0x10] sm:$0xf]
        %v711 = vld [vmem:[%s705 + $0x14] sm:$0xf]
        %v712 = vld [vmem:[%s705 + $0x18] sm:$0xf]
        %v713 = vld [vmem:[%s705 + $0x1c] sm:$0xf]
        %v714 = vld [vmem:[%s705 + $0x20] sm:$0xf]
        %v715 = vld [vmem:[%s705 + $0x24] sm:$0xf]
        %v716 = vld [vmem:[%s705 + $0x28] sm:$0xf]
        %v717 = vld [vmem:[%s705 + $0x2c] sm:$0xf]
        %v718 = vld [vmem:[%s705 + $0x30] sm:$0xf]
        %v719 = vld [vmem:[%s705 + $0x34] sm:$0xf]
        %v720 = vld [vmem:[%s705 + $0x38] sm:$0xf]
        %v721 = vld [vmem:[%s705 + $0x3c] sm:$0xf]
        %v722 = vld [vmem:[%s4 + $0x5] sm:$0x1]
        %v723 = vlaneseq
        %v724 = vshrl.u32 %v723, 7
        %v725 = vsub.s32 0, %v724
        %v726 = vrot.slane %v722, %v725
        %v743 = vunpack.c.l.b16 %v706
        %v744 = vunpack.c.l.b16 %v707
        %v745 = vunpack.c.l.b16 %v708
        %v746 = vunpack.c.l.b16 %v709
        %v747 = vunpack.c.l.b16 %v710
        %v748 = vunpack.c.l.b16 %v711
        %v749 = vunpack.c.l.b16 %v712
        %v750 = vunpack.c.l.b16 %v713
        %v751 = vunpack.c.l.b16 %v714
        %v752 = vunpack.c.l.b16 %v715
        %v753 = vunpack.c.l.b16 %v716
        %v754 = vunpack.c.l.b16 %v717
        %v755 = vunpack.c.l.b16 %v718
        %v756 = vunpack.c.l.b16 %v719
        %v757 = vunpack.c.l.b16 %v720
        %v758 = vunpack.c.l.b16 %v721
        %v759 = vpack.c.b16 %v744, %v743
        %v760 = vpack.c.b16 %v746, %v745
        %v761 = vpack.c.b16 %v748, %v747
        %v762 = vpack.c.b16 %v750, %v749
        %v763 = vpack.c.b16 %v752, %v751
        %v764 = vpack.c.b16 %v754, %v753
        %v765 = vpack.c.b16 %v756, %v755
        %v766 = vpack.c.b16 %v758, %v757
        %775 = vmatprep.subr.bf16.mxu0 0
        %776 = vmatpush1.bf16.msra.mxu0 %v759
        %777 = vmatprep.subr.bf16.mxu0 0
        %778 = vmatpush1.bf16.msra.mxu0 %v760
        %779 = vmatprep.subr.bf16.mxu0 0
        %780 = vmatpush1.bf16.msra.mxu0 %v761
        %781 = vmatprep.subr.bf16.mxu0 0
        %782 = vmatpush1.bf16.msra.mxu0 %v762
        %783 = vmatprep.subr.bf16.mxu0 0
        %784 = vmatpush1.bf16.msra.mxu0 %v763
        %785 = vmatprep.subr.bf16.mxu0 0
        %786 = vmatpush1.bf16.msra.mxu0 %v764
        %787 = vmatprep.subr.bf16.mxu0 0
        %788 = vmatpush1.bf16.msra.mxu0 %v765
        %789 = vmatprep.subr.bf16.mxu0 0
        %790 = vmatpush1.bf16.msra.mxu0 %v766
        %791 = vmatprep.subr.bf16.mxu0 0
        %792 = vmatpush1.bf16.msra.mxu0 0
        %793 = vmatprep.subr.bf16.mxu0 0
        %794 = vmatpush1.bf16.msra.mxu0 0
        %795 = vmatprep.subr.bf16.mxu0 0
        %796 = vmatpush1.bf16.msra.mxu0 0
        %797 = vmatprep.subr.bf16.mxu0 0
        %798 = vmatpush1.bf16.msra.mxu0 0
        %799 = vmatprep.subr.bf16.mxu0 0
        %800 = vmatpush1.bf16.msra.mxu0 0
        %801 = vmatprep.subr.bf16.mxu0 0
        %802 = vmatpush1.bf16.msra.mxu0 0
        %803 = vmatprep.subr.bf16.mxu0 0
        %804 = vmatpush1.bf16.msra.mxu0 0
        %805 = vmatprep.subr.bf16.mxu0 0
        %806 = vmatpush1.bf16.msra.mxu0 0
        %807 = vmatprep.mubr.bf16.mxu0 0
        %808 = vmatmul.mubr.bf16.gmra.mrb[0].mxu0 %v704
        %v809 = vpop.f32.mrb[0].mxu0
        %v810 = vadd.f32 %v726, %v809
        %v811 = vpop.f32.mrb[0].mxu0
        %v812 = vpop.f32.mrb[0].mxu0
        %v813 = vpop.f32.mrb[0].mxu0
        %814 = vdwg.mxu0
        %v815 = vadd.f32 %v810, %v516
        %816 = vst.msk [vmem:[%s230] sm:$0xff] %vm251, %v815
        %s817 = sand.u32 %s138, 1
        %s818 = scalar_lea.sflag [#allocation4], %s817
        %s819 = sand.u32 %s138, 1
        %s820 = smul.addr %s819, 8
        %s821 = scalar_lea.vmem [#allocation5], %s820
        // Predicated region
        $region45: #{tpu_custom_call.1} parent=39 // pred_check
          %p822 = pneg %p148
        $region46: #{tpu_custom_call.1} parent=39 // pred_check_branch
          %824 = sbr.rel (%p822) target = $region48
        $region47: #{tpu_custom_call.1} parent=39 // pred_region
          %s826 = ssub.s32 128, 128
          %827 = vsyncadd %s818, %s826
          %s828 = smul.addr %s20, 128
          %s829 = scalar_lea.hbm %s5, %s828
          %s831 = sshll.u32 %s821, 4
          %s832 = int_to_ptr.vmem [resolvable:$true] %s831
          %834 = dma.vmem_to_hbm [thread:$0]  %s832, 128, %s829, %s818
        $region48: #{tpu_custom_call.1} parent=39 // pred_fallthru
          _
      $region40: #{tpu_custom_call.1} parent=5 // pred_fallthru
        _
      %p835 = scmp.le.s32.totalorder 2, %s15
      // Predicated region
      $region49: #{tpu_custom_call.1} parent=5 // pred_check
        %p836 = pneg %p835
      $region50: #{tpu_custom_call.1} parent=5 // pred_check_branch
        %838 = sbr.rel (%p836) target = $region52
      $region51: #{tpu_custom_call.1} parent=5 // pred_region
        %s839 = ssub.s32 %s15, 2
        // Predicated region
        $region53: #{tpu_custom_call.1} parent=51 // pred_check
          %p840 = pneg %p154
        $region54: #{tpu_custom_call.1} parent=51 // pred_check_branch
          %842 = sbr.rel (%p840) target = $region56
        $region55: #{tpu_custom_call.1} parent=51 // pred_region
          %s843 = sand.u32 %s139, 1
          %s844 = scalar_lea.sflag [#allocation4], %s843
          %s845 = sand.u32 %s139, 1
          %s846 = smul.addr %s845, 8
          %s847 = scalar_lea.vmem [#allocation5], %s846
          %848 = dma.done %s844, 128
        $region56: #{tpu_custom_call.1} parent=51 // pred_fallthru
          _
      $region52: #{tpu_custom_call.1} parent=5 // pred_fallthru
        _
    $region6: #{tpu_custom_call.1} parent=1 // loop_footer
      %s19 = sadd.s32 1, %s15
    $region7: #{tpu_custom_call.1} parent=1 // loop_footer_branch
      %14 = sbr.rel target = $region3
    $region8: #{tpu_custom_call.1} parent=1 // loop_exit
      _
    %849 = vsyncpa [#allocation3], 1
    %s850 = scalar_lea.sflag [#allocation3], 1
    %851 = vsyncpa %s850, 1
    %852 = vsyncpa [#allocation4], 1
    %s853 = scalar_lea.sflag [#allocation4], 1
    %854 = vsyncpa %s853, 1

</llo_original>
